<compile_context>
chip_gen: v7x
topology: tpu7x:2x2x1
jax: 0.10.0
libtpu: 0.0.40
codegen_flags: <defaults>
</compile_context>

<pallas_src>
import functools

import jax
import jax.numpy as jnp
from jax.experimental import pallas as pl
from jax.experimental.pallas import tpu as pltpu


def _round_up(x, m):
    return ((x + m - 1) // m) * m


def fusion_kernel(cls_ref, img_ref, pool_ref, conv_ref, fc_ref, out_ref, *, hw_chunk):
    """Processes one block of TB batch rows (grid axis = batch blocks, "parallel")."""
    tb, hw, c_in = img_ref.shape
    ht = cls_ref.shape[1]
    cp = conv_ref.shape[1]

    # ---- text branch: BERT-pooler-style dense + tanh on the CLS tokens -------------
    # One batched [TB, Ht] @ [Ht, Ht] MXU matmul for the whole block.
    cls = cls_ref[...]                                     # [TB, Ht]
    w_pool = pool_ref[0:ht, :]                             # [Ht, Ht]
    b_pool = pool_ref[ht:ht + 1, :]                        # [1, Ht]
    text_feats = jnp.tanh(
        jnp.dot(cls, w_pool, preferred_element_type=jnp.float32) + b_pool)   # [TB, Ht]

    # ---- image branch: pointwise conv (MXU) fused with the global pool -------------
    # Per batch row, contract channels on the MXU chunk-by-chunk over HW and keep only
    # a [1, CP] running ReLU-sum live (never the full [HW, CP] fmap).
    w_conv = conv_ref[0:c_in, :]                           # [C, CP] (zero-padded cols)
    b_conv = conv_ref[c_in:c_in + 1, :]                    # [1, CP] (zero-padded cols)
    n_chunks = hw // hw_chunk
    pooled_rows = []
    for b in range(tb):                                    # static unroll, TB is tiny
        acc = jnp.zeros((1, cp), jnp.float32)
        for t in range(n_chunks):                          # static unroll over HW chunks
            chunk = img_ref[b, t * hw_chunk:(t + 1) * hw_chunk, :]      # [HWC, C]
            fm = jnp.dot(chunk, w_conv,
                         preferred_element_type=jnp.float32)            # [HWC, CP]
            acc = acc + jnp.sum(jnp.maximum(fm + b_conv, 0.0),
                                axis=0, keepdims=True)                  # sublane reduce
        pooled_rows.append(acc)
    # Sum-pooled features: the 1/HW mean factor is folded into w_fc_i at pack time.
    img_feats = (pooled_rows[0] if tb == 1
                 else jnp.concatenate(pooled_rows, axis=0))             # [TB, CP]

    # ---- fusion fc: concat([text, image]) @ W + b == split matmul sum --------------
    w_fc_t = fc_ref[0:ht, :]                               # [Ht, NCP]
    w_fc_i = fc_ref[ht:ht + cp, :]                         # [CP, NCP] (1/HW pre-folded)
    b_fc = fc_ref[ht + cp:ht + cp + 1, :]                  # [1, NCP]
    logits = (jnp.dot(text_feats, w_fc_t, preferred_element_type=jnp.float32)
              + jnp.dot(img_feats, w_fc_i, preferred_element_type=jnp.float32)
              + b_fc)                                      # [TB, NCP] lane-dense store
    out_ref[...] = logits.astype(out_ref.dtype)


def multimodal_fusion_forward(text_emb, image_nchw, params, *, batch_block=None):
    """text_emb: [B, S, H_text] f32, image_nchw: [B, C, H, W] f32 -> [B, num_classes]."""
    B, _, Ht = text_emb.shape
    _, C, H, W = image_nchw.shape
    HW = H * W

    w_pool, b_pool, w_conv, b_conv, w_fc_t, w_fc_i, b_fc = params
    c_feat = w_conv.shape[1]
    num_classes = w_fc_t.shape[1]
    CP = _round_up(max(c_feat, 128), 128)        # padded image-feature width (lanes)
    NCP = _round_up(max(num_classes, 128), 128)  # padded logits width (lanes)

    # Slab row-slices in the kernel stay (8,128)-tile aligned only if Ht % 8 == 0.
    assert Ht % 8 == 0, "H_text must be a multiple of 8 for aligned slab slicing"

    # Batch block: default = whole batch (1 grid step, right call for 1-TC v5e/v6e and
    # for tiny B). For large B on v7x pass batch_block = B // 2 (one block per TC).
    TB = B if batch_block is None else batch_block
    assert B % TB == 0 and (TB == B or TB % 8 == 0), "bad batch_block"
    n_blocks = B // TB

    # HW chunk for the fused conv+pool loop (keeps the conv intermediate to <=16 vregs).
    HWC = 128 if HW % 128 == 0 else HW

    # Only the CLS token feeds the pooler: DMA just [B, Ht], not [B, S, Ht].
    cls = text_emb[:, 0, :]                                       # [B, Ht]
    # NCHW -> channels-last [B, HW, C] (pixels on sublanes, channels contracted by MXU).
    img = jnp.transpose(image_nchw, (0, 2, 3, 1)).reshape(B, HW, C)

    # ---- pack weights/biases into three slabs (fewer DMAs, less VMEM tile padding) --
    pool_slab = jnp.concatenate([w_pool, b_pool], axis=0)         # [Ht+1, Ht]

    w_conv_p = jnp.zeros((C, CP), jnp.float32).at[:, :c_feat].set(w_conv)
    b_conv_p = jnp.zeros((1, CP), jnp.float32).at[:, :c_feat].set(b_conv)
    conv_slab = jnp.concatenate([w_conv_p, b_conv_p], axis=0)     # [C+1, CP]

    w_fc_t_p = jnp.zeros((Ht, NCP), jnp.float32).at[:, :num_classes].set(w_fc_t)
    # Fold the 1/HW mean-pool scale into the image fc weights (host-side, free).
    w_fc_i_p = (jnp.zeros((CP, NCP), jnp.float32)
                .at[:c_feat, :num_classes].set(w_fc_i / float(HW)))
    b_fc_p = jnp.zeros((1, NCP), jnp.float32).at[:, :num_classes].set(b_fc)
    fc_slab = jnp.concatenate([w_fc_t_p, w_fc_i_p, b_fc_p], axis=0)  # [Ht+CP+1, NCP]

    kernel = functools.partial(fusion_kernel, hw_chunk=HWC)

    out_padded = pl.pallas_call(
        kernel,
        out_shape=jax.ShapeDtypeStruct((B, NCP), jnp.float32),
        grid=(n_blocks,),
        in_specs=[
            pl.BlockSpec((TB, Ht), lambda i: (i, 0)),             # CLS tokens
            pl.BlockSpec((TB, HW, C), lambda i: (i, 0, 0)),       # image pixels (NHWC)
            pl.BlockSpec((Ht + 1, Ht), lambda i: (0, 0)),         # pooler slab (const)
            pl.BlockSpec((C + 1, CP), lambda i: (0, 0)),          # conv slab (const)
            pl.BlockSpec((Ht + CP + 1, NCP), lambda i: (0, 0)),   # fc slab (const)
        ],
        out_specs=pl.BlockSpec((TB, NCP), lambda i: (i, 0)),
        compiler_params=pltpu.CompilerParams(
            dimension_semantics=("parallel",)),
    )(cls, img, pool_slab, conv_slab, fc_slab)

    return out_padded[:, :num_classes]


def reference_forward(text_emb, image_nchw, params):
    """Pure-JAX reference of the modeled forward pass (correctness check)."""
    w_pool, b_pool, w_conv, b_conv, w_fc_t, w_fc_i, b_fc = params
    B, C, H, W = image_nchw.shape
    cls = text_emb[:, 0, :]
    text_feats = jnp.tanh(cls @ w_pool + b_pool)
    img = jnp.transpose(image_nchw, (0, 2, 3, 1)).reshape(B, H * W, C)
    fmap = jnp.maximum(jnp.einsum('bpc,cf->bpf', img, w_conv) + b_conv, 0.0)
    img_feats = jnp.mean(fmap, axis=1)
    return text_feats @ w_fc_t + img_feats @ w_fc_i + b_fc


if __name__ == "__main__":
    # Small shapes consistent with the module's forward:
    #   text: [B, S, H_text] token embeddings (stand-in for BERT hidden_size=768 -> 32)
    #   image: [B, C, H, W] NCHW (stand-in for 3x224x224 -> 4x16x16)
    #   image feature dim (stand-in for ResNet50's 2048) -> 64, num_classes = 3
    B, S, H_TEXT = 2, 8, 32
    C_IN, H_IMG, W_IMG = 4, 16, 16
    C_IMG_FEAT = 64
    NUM_CLASSES = 3

    key = jax.random.PRNGKey(0)
    ks = jax.random.split(key, 9)

    text_emb = jax.random.normal(ks[0], (B, S, H_TEXT), dtype=jnp.float32)
    image = jax.random.normal(ks[1], (B, C_IN, H_IMG, W_IMG), dtype=jnp.float32)

    # deterministic synthetic parameters (no checkpoint loading)
    w_pool = 0.1 * jax.random.normal(ks[2], (H_TEXT, H_TEXT), dtype=jnp.float32)
    b_pool = 0.01 * jax.random.normal(ks[3], (1, H_TEXT), dtype=jnp.float32)
    w_conv = 0.1 * jax.random.normal(ks[4], (C_IN, C_IMG_FEAT), dtype=jnp.float32)
    b_conv = 0.01 * jax.random.normal(ks[5], (1, C_IMG_FEAT), dtype=jnp.float32)
    # fc over concatenated [text_feats | image_feats]: split into two weight slabs
    w_fc_t = 0.1 * jax.random.normal(ks[6], (H_TEXT, NUM_CLASSES), dtype=jnp.float32)
    w_fc_i = 0.1 * jax.random.normal(ks[7], (C_IMG_FEAT, NUM_CLASSES), dtype=jnp.float32)
    b_fc = 0.01 * jax.random.normal(ks[8], (1, NUM_CLASSES), dtype=jnp.float32)

    params = (w_pool, b_pool, w_conv, b_conv, w_fc_t, w_fc_i, b_fc)

    out = jax.block_until_ready(multimodal_fusion_forward(text_emb, image, params))
    assert out.shape == (B, NUM_CLASSES)

    ref = jax.block_until_ready(reference_forward(text_emb, image, params))
    assert jnp.allclose(out, ref, rtol=1e-4, atol=1e-4), "kernel does not match reference"

    print("KERNEL_OK")
</pallas_src>

<mosaic_0001>
module attributes {stable_mosaic.version = 11 : i64} {
  func.func @fusion_kernel(%arg0: i32, %arg1: memref<2x32xf32, #tpu.memory_space<vmem>>, %arg2: memref<2x256x4xf32, #tpu.memory_space<vmem>>, %arg3: memref<33x32xf32, #tpu.memory_space<vmem>>, %arg4: memref<5x128xf32, #tpu.memory_space<vmem>>, %arg5: memref<161x128xf32, #tpu.memory_space<vmem>>, %arg6: memref<2x128xf32, #tpu.memory_space<vmem>>) attributes {dimension_semantics = [#tpu.dimension_semantics<parallel>], iteration_bounds = array<i64: 1>, scalar_prefetch = 0 : i64, scratch_operands = 0 : i64, tpu.core_type = #tpu.core_type<tc>, window_params = [{transform_indices = @transform_0, window_bounds = array<i64: 2, 32>}, {transform_indices = @transform_1, window_bounds = array<i64: 2, 256, 4>}, {pipeline_mode = #tpu.pipeline_mode<synchronous>, transform_indices = @transform_2, window_bounds = array<i64: 33, 32>}, {pipeline_mode = #tpu.pipeline_mode<synchronous>, transform_indices = @transform_3, window_bounds = array<i64: 5, 128>}, {pipeline_mode = #tpu.pipeline_mode<synchronous>, transform_indices = @transform_4, window_bounds = array<i64: 161, 128>}, {transform_indices = @transform_5, window_bounds = array<i64: 2, 128>}]} {
    %c0 = arith.constant 0 : index
    %c0_0 = arith.constant 0 : index
    %0 = vector.load %arg1[%c0, %c0_0] : memref<2x32xf32, #tpu.memory_space<vmem>>, vector<2x32xf32>
    %c0_1 = arith.constant 0 : index
    %c0_2 = arith.constant 0 : index
    %1 = vector.load %arg3[%c0_1, %c0_2] : memref<33x32xf32, #tpu.memory_space<vmem>>, vector<32x32xf32>
    %c32 = arith.constant 32 : index
    %c0_3 = arith.constant 0 : index
    %2 = vector.load %arg3[%c32, %c0_3] : memref<33x32xf32, #tpu.memory_space<vmem>>, vector<1x32xf32>
    %cst = arith.constant dense<0.000000e+00> : vector<2x32xf32>
    %3 = tpu.matmul %0, %1, %cst {dimension_numbers = #tpu.dot_dimension_numbers<[1], [0], [0], [1], [0, 0, 1, 1], [], []>} : vector<2x32xf32>, vector<32x32xf32>, vector<2x32xf32> -> vector<2x32xf32>
    %4 = vector.broadcast %2 : vector<1x32xf32> to vector<2x32xf32>
    %5 = arith.addf %3, %4 : vector<2x32xf32>
    %6 = math.tanh %5 : vector<2x32xf32>
    %c0_4 = arith.constant 0 : index
    %c0_5 = arith.constant 0 : index
    %7 = vector.load %arg4[%c0_4, %c0_5] : memref<5x128xf32, #tpu.memory_space<vmem>>, vector<4x128xf32>
    %c4 = arith.constant 4 : index
    %c0_6 = arith.constant 0 : index
    %8 = vector.load %arg4[%c4, %c0_6] : memref<5x128xf32, #tpu.memory_space<vmem>>, vector<1x128xf32>
    %cst_7 = arith.constant 0.000000e+00 : f32
    %9 = vector.broadcast %cst_7 : f32 to vector<1x128xf32>
    %c0_8 = arith.constant 0 : index
    %c0_9 = arith.constant 0 : index
    %c0_10 = arith.constant 0 : index
    %10 = vector.load %arg2[%c0_8, %c0_9, %c0_10] : memref<2x256x4xf32, #tpu.memory_space<vmem>>, vector<1x128x4xf32>
    %11 = vector.shape_cast %10 : vector<1x128x4xf32> to vector<128x4xf32>
    %cst_11 = arith.constant dense<0.000000e+00> : vector<128x128xf32>
    %12 = tpu.matmul %11, %7, %cst_11 {dimension_numbers = #tpu.dot_dimension_numbers<[1], [0], [0], [1], [0, 0, 1, 1], [], []>} : vector<128x4xf32>, vector<4x128xf32>, vector<128x128xf32> -> vector<128x128xf32>
    %13 = vector.broadcast %8 : vector<1x128xf32> to vector<128x128xf32>
    %14 = arith.addf %12, %13 : vector<128x128xf32>
    %cst_12 = arith.constant 0.000000e+00 : f32
    %15 = vector.broadcast %cst_12 : f32 to vector<128x128xf32>
    %16 = arith.maximumf %14, %15 : vector<128x128xf32>
    %cst_13 = arith.constant dense<0.000000e+00> : vector<128xf32>
    %17 = vector.multi_reduction <add>, %16, %cst_13 [0] : vector<128x128xf32> to vector<128xf32>
    %18 = vector.shape_cast %17 : vector<128xf32> to vector<1x128xf32>
    %19 = arith.addf %9, %18 : vector<1x128xf32>
    %c0_14 = arith.constant 0 : index
    %c128 = arith.constant 128 : index
    %c0_15 = arith.constant 0 : index
    %20 = vector.load %arg2[%c0_14, %c128, %c0_15] : memref<2x256x4xf32, #tpu.memory_space<vmem>>, vector<1x128x4xf32>
    %21 = vector.shape_cast %20 : vector<1x128x4xf32> to vector<128x4xf32>
    %cst_16 = arith.constant dense<0.000000e+00> : vector<128x128xf32>
    %22 = tpu.matmul %21, %7, %cst_16 {dimension_numbers = #tpu.dot_dimension_numbers<[1], [0], [0], [1], [0, 0, 1, 1], [], []>} : vector<128x4xf32>, vector<4x128xf32>, vector<128x128xf32> -> vector<128x128xf32>
    %23 = vector.broadcast %8 : vector<1x128xf32> to vector<128x128xf32>
    %24 = arith.addf %22, %23 : vector<128x128xf32>
    %cst_17 = arith.constant 0.000000e+00 : f32
    %25 = vector.broadcast %cst_17 : f32 to vector<128x128xf32>
    %26 = arith.maximumf %24, %25 : vector<128x128xf32>
    %cst_18 = arith.constant dense<0.000000e+00> : vector<128xf32>
    %27 = vector.multi_reduction <add>, %26, %cst_18 [0] : vector<128x128xf32> to vector<128xf32>
    %28 = vector.shape_cast %27 : vector<128xf32> to vector<1x128xf32>
    %29 = arith.addf %19, %28 : vector<1x128xf32>
    %cst_19 = arith.constant 0.000000e+00 : f32
    %30 = vector.broadcast %cst_19 : f32 to vector<1x128xf32>
    %c1 = arith.constant 1 : index
    %c0_20 = arith.constant 0 : index
    %c0_21 = arith.constant 0 : index
    %31 = vector.load %arg2[%c1, %c0_20, %c0_21] : memref<2x256x4xf32, #tpu.memory_space<vmem>>, vector<1x128x4xf32>
    %32 = vector.shape_cast %31 : vector<1x128x4xf32> to vector<128x4xf32>
    %cst_22 = arith.constant dense<0.000000e+00> : vector<128x128xf32>
    %33 = tpu.matmul %32, %7, %cst_22 {dimension_numbers = #tpu.dot_dimension_numbers<[1], [0], [0], [1], [0, 0, 1, 1], [], []>} : vector<128x4xf32>, vector<4x128xf32>, vector<128x128xf32> -> vector<128x128xf32>
    %34 = vector.broadcast %8 : vector<1x128xf32> to vector<128x128xf32>
    %35 = arith.addf %33, %34 : vector<128x128xf32>
    %cst_23 = arith.constant 0.000000e+00 : f32
    %36 = vector.broadcast %cst_23 : f32 to vector<128x128xf32>
    %37 = arith.maximumf %35, %36 : vector<128x128xf32>
    %cst_24 = arith.constant dense<0.000000e+00> : vector<128xf32>
    %38 = vector.multi_reduction <add>, %37, %cst_24 [0] : vector<128x128xf32> to vector<128xf32>
    %39 = vector.shape_cast %38 : vector<128xf32> to vector<1x128xf32>
    %40 = arith.addf %30, %39 : vector<1x128xf32>
    %c1_25 = arith.constant 1 : index
    %c128_26 = arith.constant 128 : index
    %c0_27 = arith.constant 0 : index
    %41 = vector.load %arg2[%c1_25, %c128_26, %c0_27] : memref<2x256x4xf32, #tpu.memory_space<vmem>>, vector<1x128x4xf32>
    %42 = vector.shape_cast %41 : vector<1x128x4xf32> to vector<128x4xf32>
    %cst_28 = arith.constant dense<0.000000e+00> : vector<128x128xf32>
    %43 = tpu.matmul %42, %7, %cst_28 {dimension_numbers = #tpu.dot_dimension_numbers<[1], [0], [0], [1], [0, 0, 1, 1], [], []>} : vector<128x4xf32>, vector<4x128xf32>, vector<128x128xf32> -> vector<128x128xf32>
    %44 = vector.broadcast %8 : vector<1x128xf32> to vector<128x128xf32>
    %45 = arith.addf %43, %44 : vector<128x128xf32>
    %cst_29 = arith.constant 0.000000e+00 : f32
    %46 = vector.broadcast %cst_29 : f32 to vector<128x128xf32>
    %47 = arith.maximumf %45, %46 : vector<128x128xf32>
    %cst_30 = arith.constant dense<0.000000e+00> : vector<128xf32>
    %48 = vector.multi_reduction <add>, %47, %cst_30 [0] : vector<128x128xf32> to vector<128xf32>
    %49 = vector.shape_cast %48 : vector<128xf32> to vector<1x128xf32>
    %50 = arith.addf %40, %49 : vector<1x128xf32>
    %51 = tpu.concatenate %29, %50 in 0 : vector<1x128xf32>, vector<1x128xf32> -> vector<2x128xf32>
    %c0_31 = arith.constant 0 : index
    %c0_32 = arith.constant 0 : index
    %52 = vector.load %arg5[%c0_31, %c0_32] : memref<161x128xf32, #tpu.memory_space<vmem>>, vector<32x128xf32>
    %c32_33 = arith.constant 32 : index
    %c0_34 = arith.constant 0 : index
    %53 = vector.load %arg5[%c32_33, %c0_34] : memref<161x128xf32, #tpu.memory_space<vmem>>, vector<128x128xf32>
    %c160 = arith.constant 160 : index
    %c0_35 = arith.constant 0 : index
    %54 = vector.load %arg5[%c160, %c0_35] : memref<161x128xf32, #tpu.memory_space<vmem>>, vector<1x128xf32>
    %cst_36 = arith.constant dense<0.000000e+00> : vector<2x128xf32>
    %55 = tpu.matmul %6, %52, %cst_36 {dimension_numbers = #tpu.dot_dimension_numbers<[1], [0], [0], [1], [0, 0, 1, 1], [], []>} : vector<2x32xf32>, vector<32x128xf32>, vector<2x128xf32> -> vector<2x128xf32>
    %cst_37 = arith.constant dense<0.000000e+00> : vector<2x128xf32>
    %56 = tpu.matmul %51, %53, %cst_37 {dimension_numbers = #tpu.dot_dimension_numbers<[1], [0], [0], [1], [0, 0, 1, 1], [], []>} : vector<2x128xf32>, vector<128x128xf32>, vector<2x128xf32> -> vector<2x128xf32>
    %57 = arith.addf %55, %56 : vector<2x128xf32>
    %58 = vector.broadcast %54 : vector<1x128xf32> to vector<2x128xf32>
    %59 = arith.addf %57, %58 : vector<2x128xf32>
    %c0_38 = arith.constant 0 : index
    %c0_39 = arith.constant 0 : index
    %60 = vector.load %arg6[%c0_38, %c0_39] : memref<2x128xf32, #tpu.memory_space<vmem>>, vector<2x128xf32>
    tpu.vector_store %arg6[%c0_38, %c0_39], %59 {strides = array<i32>} : memref<2x128xf32, #tpu.memory_space<vmem>>, vector<2x128xf32>,
    return
  }
  func.func @transform_0(%arg0: i32) -> (i32, i32) {
    %c0_i32 = arith.constant 0 : i32
    %c0_i32_0 = arith.constant 0 : i32
    return %arg0, %c0_i32 : i32, i32
  }
  func.func @transform_1(%arg0: i32) -> (i32, i32, i32) {
    %c0_i32 = arith.constant 0 : i32
    %c0_i32_0 = arith.constant 0 : i32
    %c0_i32_1 = arith.constant 0 : i32
    return %arg0, %c0_i32, %c0_i32_0 : i32, i32, i32
  }
  func.func @transform_2(%arg0: i32) -> (i32, i32) {
    %c0_i32 = arith.constant 0 : i32
    %c0_i32_0 = arith.constant 0 : i32
    %c0_i32_1 = arith.constant 0 : i32
    return %c0_i32, %c0_i32_0 : i32, i32
  }
  func.func @transform_3(%arg0: i32) -> (i32, i32) {
    %c0_i32 = arith.constant 0 : i32
    %c0_i32_0 = arith.constant 0 : i32
    %c0_i32_1 = arith.constant 0 : i32
    return %c0_i32, %c0_i32_0 : i32, i32
  }
  func.func @transform_4(%arg0: i32) -> (i32, i32) {
    %c0_i32 = arith.constant 0 : i32
    %c0_i32_0 = arith.constant 0 : i32
    %c0_i32_1 = arith.constant 0 : i32
    return %c0_i32, %c0_i32_0 : i32, i32
  }
  func.func @transform_5(%arg0: i32) -> (i32, i32) {
    %c0_i32 = arith.constant 0 : i32
    %c0_i32_0 = arith.constant 0 : i32
    return %arg0, %c0_i32 : i32, i32
  }
}

</mosaic_0001>

<llo_original>
// kernel: tpu_custom_call.1
$region0: #{tpu_custom_call.1}
  #allocation0 [shape = 'u32[]', space=smem, size = 0x4, offset = 0x4, fixed_abs, tag = 'smem constant byte address 0x4 - core index']
  #allocation1 [shape = 'u32[144,128]{1,0:T(1,128)}', space=vmem, size = 0x12000, scoped, tag = 'internal scratch']
  %s0 = inlined_call_operand.vmem [shape: f32[2,32], index: 0, kind: input, shape index: {}]
  %s1 = inlined_call_operand.vmem [shape: f32[2,256,4], index: 1, kind: input, shape index: {}]
  %s2 = inlined_call_operand.vmem [shape: f32[33,32], index: 2, kind: input, shape index: {}]
  %s3 = inlined_call_operand.vmem [shape: f32[5,128], index: 3, kind: input, shape index: {}]
  %s4 = inlined_call_operand.vmem [shape: f32[161,128], index: 4, kind: input, shape index: {}]
  %s5 = inlined_call_operand.hbm [shape: f32[2,128], index: 5, kind: output, shape index: {}]
  %s6 = sld [smem:[#allocation0]]
  $region30: #{tpu_custom_call.1} parent=0
    _
  %s8 = ssub.s32 1, %s6
  %s9 = scalar_select 0, %s8, %s6
  $region1: #{tpu_custom_call.1} parent=0
    #allocation2 [shape = 'u8[1024]{0}', space=vmem, size = 0x400, scoped, tag = 'output window, operand 0, single buffered']
    #allocation3 [shape = 's32[1]{0}', space=sflag, size = 0x4, scoped, tag = 'scoped memory for tpu_custom_call.1']
    %10 = vsyncpa [#allocation3], 0
    // Predicated region
    $region2: #{tpu_custom_call.1} parent=1 // pred_check
      _
    $region3: #{tpu_custom_call.1} parent=1 // pred_check_branch
      %12 = sbr.rel (0) target = $region5
    $region4: #{tpu_custom_call.1} parent=1 // pred_region
      _
    $region5: #{tpu_custom_call.1} parent=1 // pred_fallthru
      _
    // Predicated region
    $region6: #{tpu_custom_call.1} parent=1 // pred_check
      _
    $region7: #{tpu_custom_call.1} parent=1 // pred_check_branch
      %14 = sbr.rel (0) target = $region9
    $region8: #{tpu_custom_call.1} parent=1 // pred_region
      _
    $region9: #{tpu_custom_call.1} parent=1 // pred_fallthru
      _
    // Predicated region
    $region10: #{tpu_custom_call.1} parent=1 // pred_check
      _
    $region11: #{tpu_custom_call.1} parent=1 // pred_check_branch
      %16 = sbr.rel (0) target = $region13
    $region12: #{tpu_custom_call.1} parent=1 // pred_region
      _
    $region13: #{tpu_custom_call.1} parent=1 // pred_fallthru
      _
    // Predicated region
    $region14: #{tpu_custom_call.1} parent=1 // pred_check
      _
    $region15: #{tpu_custom_call.1} parent=1 // pred_check_branch
      %18 = sbr.rel (0) target = $region17
    $region16: #{tpu_custom_call.1} parent=1 // pred_region
      _
    $region17: #{tpu_custom_call.1} parent=1 // pred_fallthru
      _
    // Predicated region
    $region18: #{tpu_custom_call.1} parent=1 // pred_check
      _
    $region19: #{tpu_custom_call.1} parent=1 // pred_check_branch
      %20 = sbr.rel (0) target = $region21
    $region20: #{tpu_custom_call.1} parent=1 // pred_region
      _
    $region21: #{tpu_custom_call.1} parent=1 // pred_fallthru
      _
    %v21 = vld [vmem:[%s0] sm:$0x3]
    %v22 = vld [vmem:[%s2] sm:$0xff]
    %v23 = vld [vmem:[%s2 + $0x8] sm:$0xff]
    %v24 = vld [vmem:[%s2 + $0x10] sm:$0xff]
    %v25 = vld [vmem:[%s2 + $0x18] sm:$0xff]
    %v26 = vld [vmem:[%s2 + $0x20] sm:$0x1]
    %v27 = vlaneseq
    %v28 = vshrl.u32 %v27, 7
    %v29 = vsub.s32 0, %v28
    %v30 = vrot.slane %v26, %v29
    %vm31 = vcmask 261120
    %v33 = vsel %vm31, %v21, 0
    %35 = vmatprep.subr.mxu0 0.0
    %36 = vmatpush1.msra.mxu0 %v22
    %37 = vmatprep.subr.mxu0 0.0
    %38 = vmatpush1.msra.mxu0 %v23
    %39 = vmatprep.subr.mxu0 0.0
    %40 = vmatpush1.msra.mxu0 %v24
    %41 = vmatprep.subr.mxu0 0.0
    %42 = vmatpush1.msra.mxu0 %v25
    %43 = vmatprep.subr.mxu0 0.0
    %44 = vmatpush1.msra.mxu0 0.0
    %45 = vmatprep.subr.mxu0 0.0
    %46 = vmatpush1.msra.mxu0 0.0
    %47 = vmatprep.subr.mxu0 0.0
    %48 = vmatpush1.msra.mxu0 0.0
    %49 = vmatprep.subr.mxu0 0.0
    %50 = vmatpush1.msra.mxu0 0.0
    %51 = vmatprep.subr.mxu0 0.0
    %52 = vmatpush1.msra.mxu0 0.0
    %53 = vmatprep.subr.mxu0 0.0
    %54 = vmatpush1.msra.mxu0 0.0
    %55 = vmatprep.subr.mxu0 0.0
    %56 = vmatpush1.msra.mxu0 0.0
    %57 = vmatprep.subr.mxu0 0.0
    %58 = vmatpush1.msra.mxu0 0.0
    %59 = vmatprep.subr.mxu0 0.0
    %60 = vmatpush1.msra.mxu0 0.0
    %61 = vmatprep.subr.mxu0 0.0
    %62 = vmatpush1.msra.mxu0 0.0
    %63 = vmatprep.subr.mxu0 0.0
    %64 = vmatpush1.msra.mxu0 0.0
    %65 = vmatprep.subr.mxu0 0.0
    %66 = vmatpush1.msra.mxu0 0.0
    %67 = vmatprep.subr.mxu0 0.0
    %68 = vmatpush1.msra.mxu0 0.0
    %69 = vmatprep.subr.mxu0 0.0
    %70 = vmatpush1.msra.mxu0 0.0
    %71 = vmatprep.subr.mxu0 0.0
    %72 = vmatpush1.msra.mxu0 0.0
    %73 = vmatprep.subr.mxu0 0.0
    %74 = vmatpush1.msra.mxu0 0.0
    %75 = vmatprep.subr.mxu0 0.0
    %76 = vmatpush1.msra.mxu0 0.0
    %77 = vmatprep.subr.mxu0 0.0
    %78 = vmatpush1.msra.mxu0 0.0
    %79 = vmatprep.subr.mxu0 0.0
    %80 = vmatpush1.msra.mxu0 0.0
    %81 = vmatprep.subr.mxu0 0.0
    %82 = vmatpush1.msra.mxu0 0.0
    %83 = vmatprep.subr.mxu0 0.0
    %84 = vmatpush1.msra.mxu0 0.0
    %85 = vmatprep.subr.mxu0 0.0
    %86 = vmatpush1.msra.mxu0 0.0
    %87 = vmatprep.subr.mxu0 0.0
    %88 = vmatpush1.msra.mxu0 0.0
    %89 = vmatprep.subr.mxu0 0.0
    %90 = vmatpush1.msra.mxu0 0.0
    %91 = vmatprep.subr.mxu0 0.0
    %92 = vmatpush1.msra.mxu0 0.0
    %93 = vmatprep.subr.mxu0 0.0
    %94 = vmatpush1.msra.mxu0 0.0
    %95 = vmatprep.subr.mxu0 0.0
    %96 = vmatpush1.msra.mxu0 0.0
    %97 = vmatprep.subr.mxu0 0.0
    %98 = vmatpush1.msra.mxu0 0.0
    %99 = vmatprep.mubr.f32.mxu0 0.0
    %100 = vmatmul.mubr.f32.gmra.mrb[0].mxu0 %v33
    %v101 = vpop.f32.mrb[0].mxu0
    %v102 = vadd.f32 %v30, %v101
    %v103 = vpop.f32.mrb[0].mxu0
    %104 = vdwg.mxu0
    %v105 = vtanh.pop %v102
    %v106 = vld [vmem:[%s3] sm:$0xf]
    %v107 = vld [vmem:[%s3 + $0x4] sm:$0x1]
    %v108 = vld [vmem:[%s1] sm:$0xff]
    %v109 = vld [vmem:[%s1 + $0x8] sm:$0xff]
    %v110 = vld [vmem:[%s1 + $0x10] sm:$0xff]
    %v111 = vld [vmem:[%s1 + $0x18] sm:$0xff]
    %v112 = vld [vmem:[%s1 + $0x20] sm:$0xff]
    %v113 = vld [vmem:[%s1 + $0x28] sm:$0xff]
    %v114 = vld [vmem:[%s1 + $0x30] sm:$0xff]
    %v115 = vld [vmem:[%s1 + $0x38] sm:$0xff]
    %v116 = vld [vmem:[%s1 + $0x40] sm:$0xff]
    %v117 = vld [vmem:[%s1 + $0x48] sm:$0xff]
    %v118 = vld [vmem:[%s1 + $0x50] sm:$0xff]
    %v119 = vld [vmem:[%s1 + $0x58] sm:$0xff]
    %v120 = vld [vmem:[%s1 + $0x60] sm:$0xff]
    %v121 = vld [vmem:[%s1 + $0x68] sm:$0xff]
    %v122 = vld [vmem:[%s1 + $0x70] sm:$0xff]
    %v123 = vld [vmem:[%s1 + $0x78] sm:$0xff]
    %v124 = vlaneseq
    %v125 = vshrl.u32 %v124, 7
    %v126 = vsub.s32 0, %v125
    %v127 = vrot.slane %v107, %v126
    %vm128 = vcmask 31744
    %v130 = vsel %vm128, %v108, 0
    %v133 = vsel %vm128, %v109, 0
    %v136 = vsel %vm128, %v110, 0
    %v139 = vsel %vm128, %v111, 0
    %v142 = vsel %vm128, %v112, 0
    %v145 = vsel %vm128, %v113, 0
    %v148 = vsel %vm128, %v114, 0
    %v151 = vsel %vm128, %v115, 0
    %v154 = vsel %vm128, %v116, 0
    %v157 = vsel %vm128, %v117, 0
    %v160 = vsel %vm128, %v118, 0
    %v163 = vsel %vm128, %v119, 0
    %v166 = vsel %vm128, %v120, 0
    %v169 = vsel %vm128, %v121, 0
    %v172 = vsel %vm128, %v122, 0
    %v175 = vsel %vm128, %v123, 0
    %vm177 = vcmask 1043456
    %v179 = vsel %vm177, %v106, 0
    %181 = vmatprep.subr.mxu0 0.0
    %182 = vmatpush1.msra.mxu0 %v179
    %183 = vmatprep.subr.mxu0 0.0
    %184 = vmatpush1.msra.mxu0 0.0
    %185 = vmatprep.subr.mxu0 0.0
    %186 = vmatpush1.msra.mxu0 0.0
    %187 = vmatprep.subr.mxu0 0.0
    %188 = vmatpush1.msra.mxu0 0.0
    %189 = vmatprep.subr.mxu0 0.0
    %190 = vmatpush1.msra.mxu0 0.0
    %191 = vmatprep.subr.mxu0 0.0
    %192 = vmatpush1.msra.mxu0 0.0
    %193 = vmatprep.subr.mxu0 0.0
    %194 = vmatpush1.msra.mxu0 0.0
    %195 = vmatprep.subr.mxu0 0.0
    %196 = vmatpush1.msra.mxu0 0.0
    %197 = vmatprep.subr.mxu0 0.0
    %198 = vmatpush1.msra.mxu0 0.0
    %199 = vmatprep.subr.mxu0 0.0
    %200 = vmatpush1.msra.mxu0 0.0
    %201 = vmatprep.subr.mxu0 0.0
    %202 = vmatpush1.msra.mxu0 0.0
    %203 = vmatprep.subr.mxu0 0.0
    %204 = vmatpush1.msra.mxu0 0.0
    %205 = vmatprep.subr.mxu0 0.0
    %206 = vmatpush1.msra.mxu0 0.0
    %207 = vmatprep.subr.mxu0 0.0
    %208 = vmatpush1.msra.mxu0 0.0
    %209 = vmatprep.subr.mxu0 0.0
    %210 = vmatpush1.msra.mxu0 0.0
    %211 = vmatprep.subr.mxu0 0.0
    %212 = vmatpush1.msra.mxu0 0.0
    %213 = vmatprep.subr.mxu0 0.0
    %214 = vmatpush1.msra.mxu0 0.0
    %215 = vmatprep.subr.mxu0 0.0
    %216 = vmatpush1.msra.mxu0 0.0
    %217 = vmatprep.subr.mxu0 0.0
    %218 = vmatpush1.msra.mxu0 0.0
    %219 = vmatprep.subr.mxu0 0.0
    %220 = vmatpush1.msra.mxu0 0.0
    %221 = vmatprep.subr.mxu0 0.0
    %222 = vmatpush1.msra.mxu0 0.0
    %223 = vmatprep.subr.mxu0 0.0
    %224 = vmatpush1.msra.mxu0 0.0
    %225 = vmatprep.subr.mxu0 0.0
    %226 = vmatpush1.msra.mxu0 0.0
    %227 = vmatprep.subr.mxu0 0.0
    %228 = vmatpush1.msra.mxu0 0.0
    %229 = vmatprep.subr.mxu0 0.0
    %230 = vmatpush1.msra.mxu0 0.0
    %231 = vmatprep.subr.mxu0 0.0
    %232 = vmatpush1.msra.mxu0 0.0
    %233 = vmatprep.subr.mxu0 0.0
    %234 = vmatpush1.msra.mxu0 0.0
    %235 = vmatprep.subr.mxu0 0.0
    %236 = vmatpush1.msra.mxu0 0.0
    %237 = vmatprep.subr.mxu0 0.0
    %238 = vmatpush1.msra.mxu0 0.0
    %239 = vmatprep.subr.mxu0 0.0
    %240 = vmatpush1.msra.mxu0 0.0
    %241 = vmatprep.subr.mxu0 0.0
    %242 = vmatpush1.msra.mxu0 0.0
    %243 = vmatprep.subr.mxu0 0.0
    %244 = vmatpush1.msra.mxu0 0.0
    %245 = vmatprep.mubr.f32.mxu0 0.0
    %246 = vmatmul.mubr.f32.gmra.mrb[0].mxu0 %v130
    %v247 = vpop.f32.mrb[0].mxu0
    %v248 = vadd.f32 %v127, %v247
    %v249 = vpop.f32.mrb[0].mxu0
    %250 = vmatprep.mubr.f32.mxu0 0.0
    %251 = vmatmul.mubr.f32.gmra.mrb[0].mxu0 %v133
    %v252 = vpop.f32.mrb[0].mxu0
    %v253 = vadd.f32 %v127, %v252
    %v254 = vpop.f32.mrb[0].mxu0
    %255 = vmatprep.mubr.f32.mxu0 0.0
    %256 = vmatmul.mubr.f32.gmra.mrb[0].mxu0 %v136
    %v257 = vpop.f32.mrb[0].mxu0
    %v258 = vadd.f32 %v127, %v257
    %v259 = vpop.f32.mrb[0].mxu0
    %260 = vmatprep.mubr.f32.mxu0 0.0
    %261 = vmatmul.mubr.f32.gmra.mrb[0].mxu0 %v139
    %v262 = vpop.f32.mrb[0].mxu0
    %v263 = vadd.f32 %v127, %v262
    %v264 = vpop.f32.mrb[0].mxu0
    %265 = vmatprep.mubr.f32.mxu0 0.0
    %266 = vmatmul.mubr.f32.gmra.mrb[0].mxu0 %v142
    %v267 = vpop.f32.mrb[0].mxu0
    %v268 = vadd.f32 %v127, %v267
    %v269 = vpop.f32.mrb[0].mxu0
    %270 = vmatprep.mubr.f32.mxu0 0.0
    %271 = vmatmul.mubr.f32.gmra.mrb[0].mxu0 %v145
    %v272 = vpop.f32.mrb[0].mxu0
    %v273 = vadd.f32 %v127, %v272
    %v274 = vpop.f32.mrb[0].mxu0
    %275 = vmatprep.mubr.f32.mxu0 0.0
    %276 = vmatmul.mubr.f32.gmra.mrb[0].mxu0 %v148
    %v277 = vpop.f32.mrb[0].mxu0
    %v278 = vadd.f32 %v127, %v277
    %v279 = vpop.f32.mrb[0].mxu0
    %280 = vmatprep.mubr.f32.mxu0 0.0
    %281 = vmatmul.mubr.f32.gmra.mrb[0].mxu0 %v151
    %v282 = vpop.f32.mrb[0].mxu0
    %v283 = vadd.f32 %v127, %v282
    %v284 = vpop.f32.mrb[0].mxu0
    %285 = vmatprep.mubr.f32.mxu0 0.0
    %286 = vmatmul.mubr.f32.gmra.mrb[0].mxu0 %v154
    %v287 = vpop.f32.mrb[0].mxu0
    %v288 = vadd.f32 %v127, %v287
    %v289 = vpop.f32.mrb[0].mxu0
    %290 = vmatprep.mubr.f32.mxu0 0.0
    %291 = vmatmul.mubr.f32.gmra.mrb[0].mxu0 %v157
    %v292 = vpop.f32.mrb[0].mxu0
    %v293 = vadd.f32 %v127, %v292
    %v294 = vpop.f32.mrb[0].mxu0
    %295 = vmatprep.mubr.f32.mxu0 0.0
    %296 = vmatmul.mubr.f32.gmra.mrb[0].mxu0 %v160
    %v297 = vpop.f32.mrb[0].mxu0
    %v298 = vadd.f32 %v127, %v297
    %v299 = vpop.f32.mrb[0].mxu0
    %300 = vmatprep.mubr.f32.mxu0 0.0
    %301 = vmatmul.mubr.f32.gmra.mrb[0].mxu0 %v163
    %v302 = vpop.f32.mrb[0].mxu0
    %v303 = vadd.f32 %v127, %v302
    %v304 = vpop.f32.mrb[0].mxu0
    %305 = vmatprep.mubr.f32.mxu0 0.0
    %306 = vmatmul.mubr.f32.gmra.mrb[0].mxu0 %v166
    %v307 = vpop.f32.mrb[0].mxu0
    %v308 = vadd.f32 %v127, %v307
    %v309 = vpop.f32.mrb[0].mxu0
    %310 = vmatprep.mubr.f32.mxu0 0.0
    %311 = vmatmul.mubr.f32.gmra.mrb[0].mxu0 %v169
    %v312 = vpop.f32.mrb[0].mxu0
    %v313 = vadd.f32 %v127, %v312
    %v314 = vpop.f32.mrb[0].mxu0
    %315 = vmatprep.mubr.f32.mxu0 0.0
    %316 = vmatmul.mubr.f32.gmra.mrb[0].mxu0 %v172
    %v317 = vpop.f32.mrb[0].mxu0
    %v318 = vadd.f32 %v127, %v317
    %v319 = vpop.f32.mrb[0].mxu0
    %320 = vmatprep.mubr.f32.mxu0 0.0
    %321 = vmatmul.mubr.f32.gmra.mrb[0].mxu0 %v175
    %v322 = vpop.f32.mrb[0].mxu0
    %v323 = vadd.f32 %v127, %v322
    %v324 = vpop.f32.mrb[0].mxu0
    %325 = vdwg.mxu0
    %v326 = vmax.f32 %v248, 0.0
    %v327 = vmax.f32 %v253, 0.0
    %v328 = vmax.f32 %v258, 0.0
    %v329 = vmax.f32 %v263, 0.0
    %v330 = vmax.f32 %v268, 0.0
    %v331 = vmax.f32 %v273, 0.0
    %v332 = vmax.f32 %v278, 0.0
    %v333 = vmax.f32 %v283, 0.0
    %v334 = vmax.f32 %v288, 0.0
    %v335 = vmax.f32 %v293, 0.0
    %v336 = vmax.f32 %v298, 0.0
    %v337 = vmax.f32 %v303, 0.0
    %v338 = vmax.f32 %v308, 0.0
    %v339 = vmax.f32 %v313, 0.0
    %v340 = vmax.f32 %v318, 0.0
    %v341 = vmax.f32 %v323, 0.0
    %v342 = vadd.f32 %v326, %v327
    %v343 = vadd.f32 %v342, %v328
    %v344 = vadd.f32 %v343, %v329
    %v345 = vadd.f32 %v344, %v330
    %v346 = vadd.f32 %v345, %v331
    %v347 = vadd.f32 %v346, %v332
    %v348 = vadd.f32 %v347, %v333
    %v349 = vadd.f32 %v348, %v334
    %v350 = vadd.f32 %v349, %v335
    %v351 = vadd.f32 %v350, %v336
    %v352 = vadd.f32 %v351, %v337
    %v353 = vadd.f32 %v352, %v338
    %v354 = vadd.f32 %v353, %v339
    %v355 = vadd.f32 %v354, %v340
    %v356 = vadd.f32 %v355, %v341
    %v357 = vrot.slane %v356, 4
    %v358 = vadd.f32 %v356, %v357
    %v359 = vrot.slane %v358, 2
    %v360 = vadd.f32 %v358, %v359
    %v361 = vrot.slane %v360, 1
    %v362 = vadd.f32 %v360, %v361
    %v363 = vadd.f32 %v362, 0.0
    %v364 = vld [vmem:[%s1 + $0x80] sm:$0xff]
    %v365 = vld [vmem:[%s1 + $0x88] sm:$0xff]
    %v366 = vld [vmem:[%s1 + $0x90] sm:$0xff]
    %v367 = vld [vmem:[%s1 + $0x98] sm:$0xff]
    %v368 = vld [vmem:[%s1 + $0xa0] sm:$0xff]
    %v369 = vld [vmem:[%s1 + $0xa8] sm:$0xff]
    %v370 = vld [vmem:[%s1 + $0xb0] sm:$0xff]
    %v371 = vld [vmem:[%s1 + $0xb8] sm:$0xff]
    %v372 = vld [vmem:[%s1 + $0xc0] sm:$0xff]
    %v373 = vld [vmem:[%s1 + $0xc8] sm:$0xff]
    %v374 = vld [vmem:[%s1 + $0xd0] sm:$0xff]
    %v375 = vld [vmem:[%s1 + $0xd8] sm:$0xff]
    %v376 = vld [vmem:[%s1 + $0xe0] sm:$0xff]
    %v377 = vld [vmem:[%s1 + $0xe8] sm:$0xff]
    %v378 = vld [vmem:[%s1 + $0xf0] sm:$0xff]
    %v379 = vld [vmem:[%s1 + $0xf8] sm:$0xff]
    %v381 = vsel %vm128, %v364, 0
    %v384 = vsel %vm128, %v365, 0
    %v387 = vsel %vm128, %v366, 0
    %v390 = vsel %vm128, %v367, 0
    %v393 = vsel %vm128, %v368, 0
    %v396 = vsel %vm128, %v369, 0
    %v399 = vsel %vm128, %v370, 0
    %v402 = vsel %vm128, %v371, 0
    %v405 = vsel %vm128, %v372, 0
    %v408 = vsel %vm128, %v373, 0
    %v411 = vsel %vm128, %v374, 0
    %v414 = vsel %vm128, %v375, 0
    %v417 = vsel %vm128, %v376, 0
    %v420 = vsel %vm128, %v377, 0
    %v423 = vsel %vm128, %v378, 0
    %v426 = vsel %vm128, %v379, 0
    %428 = vmatprep.subr.mxu0 0.0
    %429 = vmatpush1.msra.mxu0 %v179
    %430 = vmatprep.subr.mxu0 0.0
    %431 = vmatpush1.msra.mxu0 0.0
    %432 = vmatprep.subr.mxu0 0.0
    %433 = vmatpush1.msra.mxu0 0.0
    %434 = vmatprep.subr.mxu0 0.0
    %435 = vmatpush1.msra.mxu0 0.0
    %436 = vmatprep.subr.mxu0 0.0
    %437 = vmatpush1.msra.mxu0 0.0
    %438 = vmatprep.subr.mxu0 0.0
    %439 = vmatpush1.msra.mxu0 0.0
    %440 = vmatprep.subr.mxu0 0.0
    %441 = vmatpush1.msra.mxu0 0.0
    %442 = vmatprep.subr.mxu0 0.0
    %443 = vmatpush1.msra.mxu0 0.0
    %444 = vmatprep.subr.mxu0 0.0
    %445 = vmatpush1.msra.mxu0 0.0
    %446 = vmatprep.subr.mxu0 0.0
    %447 = vmatpush1.msra.mxu0 0.0
    %448 = vmatprep.subr.mxu0 0.0
    %449 = vmatpush1.msra.mxu0 0.0
    %450 = vmatprep.subr.mxu0 0.0
    %451 = vmatpush1.msra.mxu0 0.0
    %452 = vmatprep.subr.mxu0 0.0
    %453 = vmatpush1.msra.mxu0 0.0
    %454 = vmatprep.subr.mxu0 0.0
    %455 = vmatpush1.msra.mxu0 0.0
    %456 = vmatprep.subr.mxu0 0.0
    %457 = vmatpush1.msra.mxu0 0.0
    %458 = vmatprep.subr.mxu0 0.0
    %459 = vmatpush1.msra.mxu0 0.0
    %460 = vmatprep.subr.mxu0 0.0
    %461 = vmatpush1.msra.mxu0 0.0
    %462 = vmatprep.subr.mxu0 0.0
    %463 = vmatpush1.msra.mxu0 0.0
    %464 = vmatprep.subr.mxu0 0.0
    %465 = vmatpush1.msra.mxu0 0.0
    %466 = vmatprep.subr.mxu0 0.0
    %467 = vmatpush1.msra.mxu0 0.0
    %468 = vmatprep.subr.mxu0 0.0
    %469 = vmatpush1.msra.mxu0 0.0
    %470 = vmatprep.subr.mxu0 0.0
    %471 = vmatpush1.msra.mxu0 0.0
    %472 = vmatprep.subr.mxu0 0.0
    %473 = vmatpush1.msra.mxu0 0.0
    %474 = vmatprep.subr.mxu0 0.0
    %475 = vmatpush1.msra.mxu0 0.0
    %476 = vmatprep.subr.mxu0 0.0
    %477 = vmatpush1.msra.mxu0 0.0
    %478 = vmatprep.subr.mxu0 0.0
    %479 = vmatpush1.msra.mxu0 0.0
    %480 = vmatprep.subr.mxu0 0.0
    %481 = vmatpush1.msra.mxu0 0.0
    %482 = vmatprep.subr.mxu0 0.0
    %483 = vmatpush1.msra.mxu0 0.0
    %484 = vmatprep.subr.mxu0 0.0
    %485 = vmatpush1.msra.mxu0 0.0
    %486 = vmatprep.subr.mxu0 0.0
    %487 = vmatpush1.msra.mxu0 0.0
    %488 = vmatprep.subr.mxu0 0.0
    %489 = vmatpush1.msra.mxu0 0.0
    %490 = vmatprep.subr.mxu0 0.0
    %491 = vmatpush1.msra.mxu0 0.0
    %492 = vmatprep.mubr.f32.mxu0 0.0
    %493 = vmatmul.mubr.f32.gmra.mrb[0].mxu0 %v381
    %v494 = vpop.f32.mrb[0].mxu0
    %v495 = vadd.f32 %v127, %v494
    %v496 = vpop.f32.mrb[0].mxu0
    %497 = vmatprep.mubr.f32.mxu0 0.0
    %498 = vmatmul.mubr.f32.gmra.mrb[0].mxu0 %v384
    %v499 = vpop.f32.mrb[0].mxu0
    %v500 = vadd.f32 %v127, %v499
    %v501 = vpop.f32.mrb[0].mxu0
    %502 = vmatprep.mubr.f32.mxu0 0.0
    %503 = vmatmul.mubr.f32.gmra.mrb[0].mxu0 %v387
    %v504 = vpop.f32.mrb[0].mxu0
    %v505 = vadd.f32 %v127, %v504
    %v506 = vpop.f32.mrb[0].mxu0
    %507 = vmatprep.mubr.f32.mxu0 0.0
    %508 = vmatmul.mubr.f32.gmra.mrb[0].mxu0 %v390
    %v509 = vpop.f32.mrb[0].mxu0
    %v510 = vadd.f32 %v127, %v509
    %v511 = vpop.f32.mrb[0].mxu0
    %512 = vmatprep.mubr.f32.mxu0 0.0
    %513 = vmatmul.mubr.f32.gmra.mrb[0].mxu0 %v393
    %v514 = vpop.f32.mrb[0].mxu0
    %v515 = vadd.f32 %v127, %v514
    %v516 = vpop.f32.mrb[0].mxu0
    %517 = vmatprep.mubr.f32.mxu0 0.0
    %518 = vmatmul.mubr.f32.gmra.mrb[0].mxu0 %v396
    %v519 = vpop.f32.mrb[0].mxu0
    %v520 = vadd.f32 %v127, %v519
    %v521 = vpop.f32.mrb[0].mxu0
    %522 = vmatprep.mubr.f32.mxu0 0.0
    %523 = vmatmul.mubr.f32.gmra.mrb[0].mxu0 %v399
    %v524 = vpop.f32.mrb[0].mxu0
    %v525 = vadd.f32 %v127, %v524
    %v526 = vpop.f32.mrb[0].mxu0
    %527 = vmatprep.mubr.f32.mxu0 0.0
    %528 = vmatmul.mubr.f32.gmra.mrb[0].mxu0 %v402
    %v529 = vpop.f32.mrb[0].mxu0
    %v530 = vadd.f32 %v127, %v529
    %v531 = vpop.f32.mrb[0].mxu0
    %532 = vmatprep.mubr.f32.mxu0 0.0
    %533 = vmatmul.mubr.f32.gmra.mrb[0].mxu0 %v405
    %v534 = vpop.f32.mrb[0].mxu0
    %v535 = vadd.f32 %v127, %v534
    %v536 = vpop.f32.mrb[0].mxu0
    %537 = vmatprep.mubr.f32.mxu0 0.0
    %538 = vmatmul.mubr.f32.gmra.mrb[0].mxu0 %v408
    %v539 = vpop.f32.mrb[0].mxu0
    %v540 = vadd.f32 %v127, %v539
    %v541 = vpop.f32.mrb[0].mxu0
    %542 = vmatprep.mubr.f32.mxu0 0.0
    %543 = vmatmul.mubr.f32.gmra.mrb[0].mxu0 %v411
    %v544 = vpop.f32.mrb[0].mxu0
    %v545 = vadd.f32 %v127, %v544
    %v546 = vpop.f32.mrb[0].mxu0
    %547 = vmatprep.mubr.f32.mxu0 0.0
    %548 = vmatmul.mubr.f32.gmra.mrb[0].mxu0 %v414
    %v549 = vpop.f32.mrb[0].mxu0
    %v550 = vadd.f32 %v127, %v549
    %v551 = vpop.f32.mrb[0].mxu0
    %552 = vmatprep.mubr.f32.mxu0 0.0
    %553 = vmatmul.mubr.f32.gmra.mrb[0].mxu0 %v417
    %v554 = vpop.f32.mrb[0].mxu0
    %v555 = vadd.f32 %v127, %v554
    %v556 = vpop.f32.mrb[0].mxu0
    %557 = vmatprep.mubr.f32.mxu0 0.0
    %558 = vmatmul.mubr.f32.gmra.mrb[0].mxu0 %v420
    %v559 = vpop.f32.mrb[0].mxu0
    %v560 = vadd.f32 %v127, %v559
    %v561 = vpop.f32.mrb[0].mxu0
    %562 = vmatprep.mubr.f32.mxu0 0.0
    %563 = vmatmul.mubr.f32.gmra.mrb[0].mxu0 %v423
    %v564 = vpop.f32.mrb[0].mxu0
    %v565 = vadd.f32 %v127, %v564
    %v566 = vpop.f32.mrb[0].mxu0
    %567 = vmatprep.mubr.f32.mxu0 0.0
    %568 = vmatmul.mubr.f32.gmra.mrb[0].mxu0 %v426
    %v569 = vpop.f32.mrb[0].mxu0
    %v570 = vadd.f32 %v127, %v569
    %v571 = vpop.f32.mrb[0].mxu0
    %572 = vdwg.mxu0
    %v573 = vmax.f32 %v495, 0.0
    %v574 = vmax.f32 %v500, 0.0
    %v575 = vmax.f32 %v505, 0.0
    %v576 = vmax.f32 %v510, 0.0
    %v577 = vmax.f32 %v515, 0.0
    %v578 = vmax.f32 %v520, 0.0
    %v579 = vmax.f32 %v525, 0.0
    %v580 = vmax.f32 %v530, 0.0
    %v581 = vmax.f32 %v535, 0.0
    %v582 = vmax.f32 %v540, 0.0
    %v583 = vmax.f32 %v545, 0.0
    %v584 = vmax.f32 %v550, 0.0
    %v585 = vmax.f32 %v555, 0.0
    %v586 = vmax.f32 %v560, 0.0
    %v587 = vmax.f32 %v565, 0.0
    %v588 = vmax.f32 %v570, 0.0
    %v589 = vadd.f32 %v573, %v574
    %v590 = vadd.f32 %v589, %v575
    %v591 = vadd.f32 %v590, %v576
    %v592 = vadd.f32 %v591, %v577
    %v593 = vadd.f32 %v592, %v578
    %v594 = vadd.f32 %v593, %v579
    %v595 = vadd.f32 %v594, %v580
    %v596 = vadd.f32 %v595, %v581
    %v597 = vadd.f32 %v596, %v582
    %v598 = vadd.f32 %v597, %v583
    %v599 = vadd.f32 %v598, %v584
    %v600 = vadd.f32 %v599, %v585
    %v601 = vadd.f32 %v600, %v586
    %v602 = vadd.f32 %v601, %v587
    %v603 = vadd.f32 %v602, %v588
    %v604 = vrot.slane %v603, 4
    %v605 = vadd.f32 %v603, %v604
    %v606 = vrot.slane %v605, 2
    %v607 = vadd.f32 %v605, %v606
    %v608 = vrot.slane %v607, 1
    %v609 = vadd.f32 %v607, %v608
    %v610 = vadd.f32 %v363, %v609
    %s611 = scalar_lea.vmem %s1, 256
    %v612 = vld [vmem:[%s611] sm:$0xff]
    %v613 = vld [vmem:[%s611 + $0x8] sm:$0xff]
    %v614 = vld [vmem:[%s611 + $0x10] sm:$0xff]
    %v615 = vld [vmem:[%s611 + $0x18] sm:$0xff]
    %v616 = vld [vmem:[%s611 + $0x20] sm:$0xff]
    %v617 = vld [vmem:[%s611 + $0x28] sm:$0xff]
    %v618 = vld [vmem:[%s611 + $0x30] sm:$0xff]
    %v619 = vld [vmem:[%s611 + $0x38] sm:$0xff]
    %v620 = vld [vmem:[%s611 + $0x40] sm:$0xff]
    %v621 = vld [vmem:[%s611 + $0x48] sm:$0xff]
    %v622 = vld [vmem:[%s611 + $0x50] sm:$0xff]
    %v623 = vld [vmem:[%s611 + $0x58] sm:$0xff]
    %v624 = vld [vmem:[%s611 + $0x60] sm:$0xff]
    %v625 = vld [vmem:[%s611 + $0x68] sm:$0xff]
    %v626 = vld [vmem:[%s611 + $0x70] sm:$0xff]
    %v627 = vld [vmem:[%s611 + $0x78] sm:$0xff]
    %v629 = vsel %vm128, %v612, 0
    %v632 = vsel %vm128, %v613, 0
    %v635 = vsel %vm128, %v614, 0
    %v638 = vsel %vm128, %v615, 0
    %v641 = vsel %vm128, %v616, 0
    %v644 = vsel %vm128, %v617, 0
    %v647 = vsel %vm128, %v618, 0
    %v650 = vsel %vm128, %v619, 0
    %v653 = vsel %vm128, %v620, 0
    %v656 = vsel %vm128, %v621, 0
    %v659 = vsel %vm128, %v622, 0
    %v662 = vsel %vm128, %v623, 0
    %v665 = vsel %vm128, %v624, 0
    %v668 = vsel %vm128, %v625, 0
    %v671 = vsel %vm128, %v626, 0
    %v674 = vsel %vm128, %v627, 0
    %676 = vmatprep.subr.mxu0 0.0
    %677 = vmatpush1.msra.mxu0 %v179
    %678 = vmatprep.subr.mxu0 0.0
    %679 = vmatpush1.msra.mxu0 0.0
    %680 = vmatprep.subr.mxu0 0.0
    %681 = vmatpush1.msra.mxu0 0.0
    %682 = vmatprep.subr.mxu0 0.0
    %683 = vmatpush1.msra.mxu0 0.0
    %684 = vmatprep.subr.mxu0 0.0
    %685 = vmatpush1.msra.mxu0 0.0
    %686 = vmatprep.subr.mxu0 0.0
    %687 = vmatpush1.msra.mxu0 0.0
    %688 = vmatprep.subr.mxu0 0.0
    %689 = vmatpush1.msra.mxu0 0.0
    %690 = vmatprep.subr.mxu0 0.0
    %691 = vmatpush1.msra.mxu0 0.0
    %692 = vmatprep.subr.mxu0 0.0
    %693 = vmatpush1.msra.mxu0 0.0
    %694 = vmatprep.subr.mxu0 0.0
    %695 = vmatpush1.msra.mxu0 0.0
    %696 = vmatprep.subr.mxu0 0.0
    %697 = vmatpush1.msra.mxu0 0.0
    %698 = vmatprep.subr.mxu0 0.0
    %699 = vmatpush1.msra.mxu0 0.0
    %700 = vmatprep.subr.mxu0 0.0
    %701 = vmatpush1.msra.mxu0 0.0
    %702 = vmatprep.subr.mxu0 0.0
    %703 = vmatpush1.msra.mxu0 0.0
    %704 = vmatprep.subr.mxu0 0.0
    %705 = vmatpush1.msra.mxu0 0.0
    %706 = vmatprep.subr.mxu0 0.0
    %707 = vmatpush1.msra.mxu0 0.0
    %708 = vmatprep.subr.mxu0 0.0
    %709 = vmatpush1.msra.mxu0 0.0
    %710 = vmatprep.subr.mxu0 0.0
    %711 = vmatpush1.msra.mxu0 0.0
    %712 = vmatprep.subr.mxu0 0.0
    %713 = vmatpush1.msra.mxu0 0.0
    %714 = vmatprep.subr.mxu0 0.0
    %715 = vmatpush1.msra.mxu0 0.0
    %716 = vmatprep.subr.mxu0 0.0
    %717 = vmatpush1.msra.mxu0 0.0
    %718 = vmatprep.subr.mxu0 0.0
    %719 = vmatpush1.msra.mxu0 0.0
    %720 = vmatprep.subr.mxu0 0.0
    %721 = vmatpush1.msra.mxu0 0.0
    %722 = vmatprep.subr.mxu0 0.0
    %723 = vmatpush1.msra.mxu0 0.0
    %724 = vmatprep.subr.mxu0 0.0
    %725 = vmatpush1.msra.mxu0 0.0
    %726 = vmatprep.subr.mxu0 0.0
    %727 = vmatpush1.msra.mxu0 0.0
    %728 = vmatprep.subr.mxu0 0.0
    %729 = vmatpush1.msra.mxu0 0.0
    %730 = vmatprep.subr.mxu0 0.0
    %731 = vmatpush1.msra.mxu0 0.0
    %732 = vmatprep.subr.mxu0 0.0
    %733 = vmatpush1.msra.mxu0 0.0
    %734 = vmatprep.subr.mxu0 0.0
    %735 = vmatpush1.msra.mxu0 0.0
    %736 = vmatprep.subr.mxu0 0.0
    %737 = vmatpush1.msra.mxu0 0.0
    %738 = vmatprep.subr.mxu0 0.0
    %739 = vmatpush1.msra.mxu0 0.0
    %740 = vmatprep.mubr.f32.mxu0 0.0
    %741 = vmatmul.mubr.f32.gmra.mrb[0].mxu0 %v629
    %v742 = vpop.f32.mrb[0].mxu0
    %v743 = vadd.f32 %v127, %v742
    %v744 = vpop.f32.mrb[0].mxu0
    %745 = vmatprep.mubr.f32.mxu0 0.0
    %746 = vmatmul.mubr.f32.gmra.mrb[0].mxu0 %v632
    %v747 = vpop.f32.mrb[0].mxu0
    %v748 = vadd.f32 %v127, %v747
    %v749 = vpop.f32.mrb[0].mxu0
    %750 = vmatprep.mubr.f32.mxu0 0.0
    %751 = vmatmul.mubr.f32.gmra.mrb[0].mxu0 %v635
    %v752 = vpop.f32.mrb[0].mxu0
    %v753 = vadd.f32 %v127, %v752
    %v754 = vpop.f32.mrb[0].mxu0
    %755 = vmatprep.mubr.f32.mxu0 0.0
    %756 = vmatmul.mubr.f32.gmra.mrb[0].mxu0 %v638
    %v757 = vpop.f32.mrb[0].mxu0
    %v758 = vadd.f32 %v127, %v757
    %v759 = vpop.f32.mrb[0].mxu0
    %760 = vmatprep.mubr.f32.mxu0 0.0
    %761 = vmatmul.mubr.f32.gmra.mrb[0].mxu0 %v641
    %v762 = vpop.f32.mrb[0].mxu0
    %v763 = vadd.f32 %v127, %v762
    %v764 = vpop.f32.mrb[0].mxu0
    %765 = vmatprep.mubr.f32.mxu0 0.0
    %766 = vmatmul.mubr.f32.gmra.mrb[0].mxu0 %v644
    %v767 = vpop.f32.mrb[0].mxu0
    %v768 = vadd.f32 %v127, %v767
    %v769 = vpop.f32.mrb[0].mxu0
    %770 = vmatprep.mubr.f32.mxu0 0.0
    %771 = vmatmul.mubr.f32.gmra.mrb[0].mxu0 %v647
    %v772 = vpop.f32.mrb[0].mxu0
    %v773 = vadd.f32 %v127, %v772
    %v774 = vpop.f32.mrb[0].mxu0
    %775 = vmatprep.mubr.f32.mxu0 0.0
    %776 = vmatmul.mubr.f32.gmra.mrb[0].mxu0 %v650
    %v777 = vpop.f32.mrb[0].mxu0
    %v778 = vadd.f32 %v127, %v777
    %v779 = vpop.f32.mrb[0].mxu0
    %780 = vmatprep.mubr.f32.mxu0 0.0
    %781 = vmatmul.mubr.f32.gmra.mrb[0].mxu0 %v653
    %v782 = vpop.f32.mrb[0].mxu0
    %v783 = vadd.f32 %v127, %v782
    %v784 = vpop.f32.mrb[0].mxu0
    %785 = vmatprep.mubr.f32.mxu0 0.0
    %786 = vmatmul.mubr.f32.gmra.mrb[0].mxu0 %v656
    %v787 = vpop.f32.mrb[0].mxu0
    %v788 = vadd.f32 %v127, %v787
    %v789 = vpop.f32.mrb[0].mxu0
    %790 = vmatprep.mubr.f32.mxu0 0.0
    %791 = vmatmul.mubr.f32.gmra.mrb[0].mxu0 %v659
    %v792 = vpop.f32.mrb[0].mxu0
    %v793 = vadd.f32 %v127, %v792
    %v794 = vpop.f32.mrb[0].mxu0
    %795 = vmatprep.mubr.f32.mxu0 0.0
    %796 = vmatmul.mubr.f32.gmra.mrb[0].mxu0 %v662
    %v797 = vpop.f32.mrb[0].mxu0
    %v798 = vadd.f32 %v127, %v797
    %v799 = vpop.f32.mrb[0].mxu0
    %800 = vmatprep.mubr.f32.mxu0 0.0
    %801 = vmatmul.mubr.f32.gmra.mrb[0].mxu0 %v665
    %v802 = vpop.f32.mrb[0].mxu0
    %v803 = vadd.f32 %v127, %v802
    %v804 = vpop.f32.mrb[0].mxu0
    %805 = vmatprep.mubr.f32.mxu0 0.0
    %806 = vmatmul.mubr.f32.gmra.mrb[0].mxu0 %v668
    %v807 = vpop.f32.mrb[0].mxu0
    %v808 = vadd.f32 %v127, %v807
    %v809 = vpop.f32.mrb[0].mxu0
    %810 = vmatprep.mubr.f32.mxu0 0.0
    %811 = vmatmul.mubr.f32.gmra.mrb[0].mxu0 %v671
    %v812 = vpop.f32.mrb[0].mxu0
    %v813 = vadd.f32 %v127, %v812
    %v814 = vpop.f32.mrb[0].mxu0
    %815 = vmatprep.mubr.f32.mxu0 0.0
    %816 = vmatmul.mubr.f32.gmra.mrb[0].mxu0 %v674
    %v817 = vpop.f32.mrb[0].mxu0
    %v818 = vadd.f32 %v127, %v817
    %v819 = vpop.f32.mrb[0].mxu0
    %820 = vdwg.mxu0
    %v821 = vmax.f32 %v743, 0.0
    %v822 = vmax.f32 %v748, 0.0
    %v823 = vmax.f32 %v753, 0.0
    %v824 = vmax.f32 %v758, 0.0
    %v825 = vmax.f32 %v763, 0.0
    %v826 = vmax.f32 %v768, 0.0
    %v827 = vmax.f32 %v773, 0.0
    %v828 = vmax.f32 %v778, 0.0
    %v829 = vmax.f32 %v783, 0.0
    %v830 = vmax.f32 %v788, 0.0
    %v831 = vmax.f32 %v793, 0.0
    %v832 = vmax.f32 %v798, 0.0
    %v833 = vmax.f32 %v803, 0.0
    %v834 = vmax.f32 %v808, 0.0
    %v835 = vmax.f32 %v813, 0.0
    %v836 = vmax.f32 %v818, 0.0
    %v837 = vadd.f32 %v821, %v822
    %v838 = vadd.f32 %v837, %v823
    %v839 = vadd.f32 %v838, %v824
    %v840 = vadd.f32 %v839, %v825
    %v841 = vadd.f32 %v840, %v826
    %v842 = vadd.f32 %v841, %v827
    %v843 = vadd.f32 %v842, %v828
    %v844 = vadd.f32 %v843, %v829
    %v845 = vadd.f32 %v844, %v830
    %v846 = vadd.f32 %v845, %v831
    %v847 = vadd.f32 %v846, %v832
    %v848 = vadd.f32 %v847, %v833
    %v849 = vadd.f32 %v848, %v834
    %v850 = vadd.f32 %v849, %v835
    %v851 = vadd.f32 %v850, %v836
    %v852 = vrot.slane %v851, 4
    %v853 = vadd.f32 %v851, %v852
    %v854 = vrot.slane %v853, 2
    %v855 = vadd.f32 %v853, %v854
    %v856 = vrot.slane %v855, 1
    %v857 = vadd.f32 %v855, %v856
    %v858 = vadd.f32 %v857, 0.0
    %v859 = vld [vmem:[%s611 + $0x80] sm:$0xff]
    %v860 = vld [vmem:[%s611 + $0x88] sm:$0xff]
    %v861 = vld [vmem:[%s611 + $0x90] sm:$0xff]
    %v862 = vld [vmem:[%s611 + $0x98] sm:$0xff]
    %v863 = vld [vmem:[%s611 + $0xa0] sm:$0xff]
    %v864 = vld [vmem:[%s611 + $0xa8] sm:$0xff]
    %v865 = vld [vmem:[%s611 + $0xb0] sm:$0xff]
    %v866 = vld [vmem:[%s611 + $0xb8] sm:$0xff]
    %v867 = vld [vmem:[%s611 + $0xc0] sm:$0xff]
    %v868 = vld [vmem:[%s611 + $0xc8] sm:$0xff]
    %v869 = vld [vmem:[%s611 + $0xd0] sm:$0xff]
    %v870 = vld [vmem:[%s611 + $0xd8] sm:$0xff]
    %v871 = vld [vmem:[%s611 + $0xe0] sm:$0xff]
    %v872 = vld [vmem:[%s611 + $0xe8] sm:$0xff]
    %v873 = vld [vmem:[%s611 + $0xf0] sm:$0xff]
    %v874 = vld [vmem:[%s611 + $0xf8] sm:$0xff]
    %v876 = vsel %vm128, %v859, 0
    %v879 = vsel %vm128, %v860, 0
    %v882 = vsel %vm128, %v861, 0
    %v885 = vsel %vm128, %v862, 0
    %v888 = vsel %vm128, %v863, 0
    %v891 = vsel %vm128, %v864, 0
    %v894 = vsel %vm128, %v865, 0
    %v897 = vsel %vm128, %v866, 0
    %v900 = vsel %vm128, %v867, 0
    %v903 = vsel %vm128, %v868, 0
    %v906 = vsel %vm128, %v869, 0
    %v909 = vsel %vm128, %v870, 0
    %v912 = vsel %vm128, %v871, 0
    %v915 = vsel %vm128, %v872, 0
    %v918 = vsel %vm128, %v873, 0
    %v921 = vsel %vm128, %v874, 0
    %923 = vmatprep.subr.mxu0 0.0
    %924 = vmatpush1.msra.mxu0 %v179
    %925 = vmatprep.subr.mxu0 0.0
    %926 = vmatpush1.msra.mxu0 0.0
    %927 = vmatprep.subr.mxu0 0.0
    %928 = vmatpush1.msra.mxu0 0.0
    %929 = vmatprep.subr.mxu0 0.0
    %930 = vmatpush1.msra.mxu0 0.0
    %931 = vmatprep.subr.mxu0 0.0
    %932 = vmatpush1.msra.mxu0 0.0
    %933 = vmatprep.subr.mxu0 0.0
    %934 = vmatpush1.msra.mxu0 0.0
    %935 = vmatprep.subr.mxu0 0.0
    %936 = vmatpush1.msra.mxu0 0.0
    %937 = vmatprep.subr.mxu0 0.0
    %938 = vmatpush1.msra.mxu0 0.0
    %939 = vmatprep.subr.mxu0 0.0
    %940 = vmatpush1.msra.mxu0 0.0
    %941 = vmatprep.subr.mxu0 0.0
    %942 = vmatpush1.msra.mxu0 0.0
    %943 = vmatprep.subr.mxu0 0.0
    %944 = vmatpush1.msra.mxu0 0.0
    %945 = vmatprep.subr.mxu0 0.0
    %946 = vmatpush1.msra.mxu0 0.0
    %947 = vmatprep.subr.mxu0 0.0
    %948 = vmatpush1.msra.mxu0 0.0
    %949 = vmatprep.subr.mxu0 0.0
    %950 = vmatpush1.msra.mxu0 0.0
    %951 = vmatprep.subr.mxu0 0.0
    %952 = vmatpush1.msra.mxu0 0.0
    %953 = vmatprep.subr.mxu0 0.0
    %954 = vmatpush1.msra.mxu0 0.0
    %955 = vmatprep.subr.mxu0 0.0
    %956 = vmatpush1.msra.mxu0 0.0
    %957 = vmatprep.subr.mxu0 0.0
    %958 = vmatpush1.msra.mxu0 0.0
    %959 = vmatprep.subr.mxu0 0.0
    %960 = vmatpush1.msra.mxu0 0.0
    %961 = vmatprep.subr.mxu0 0.0
    %962 = vmatpush1.msra.mxu0 0.0
    %963 = vmatprep.subr.mxu0 0.0
    %964 = vmatpush1.msra.mxu0 0.0
    %965 = vmatprep.subr.mxu0 0.0
    %966 = vmatpush1.msra.mxu0 0.0
    %967 = vmatprep.subr.mxu0 0.0
    %968 = vmatpush1.msra.mxu0 0.0
    %969 = vmatprep.subr.mxu0 0.0
    %970 = vmatpush1.msra.mxu0 0.0
    %971 = vmatprep.subr.mxu0 0.0
    %972 = vmatpush1.msra.mxu0 0.0
    %973 = vmatprep.subr.mxu0 0.0
    %974 = vmatpush1.msra.mxu0 0.0
    %975 = vmatprep.subr.mxu0 0.0
    %976 = vmatpush1.msra.mxu0 0.0
    %977 = vmatprep.subr.mxu0 0.0
    %978 = vmatpush1.msra.mxu0 0.0
    %979 = vmatprep.subr.mxu0 0.0
    %980 = vmatpush1.msra.mxu0 0.0
    %981 = vmatprep.subr.mxu0 0.0
    %982 = vmatpush1.msra.mxu0 0.0
    %983 = vmatprep.subr.mxu0 0.0
    %984 = vmatpush1.msra.mxu0 0.0
    %985 = vmatprep.subr.mxu0 0.0
    %986 = vmatpush1.msra.mxu0 0.0
    %987 = vmatprep.mubr.f32.mxu0 0.0
    %988 = vmatmul.mubr.f32.gmra.mrb[0].mxu0 %v876
    %v989 = vpop.f32.mrb[0].mxu0
    %v990 = vadd.f32 %v127, %v989
    %v991 = vpop.f32.mrb[0].mxu0
    %992 = vmatprep.mubr.f32.mxu0 0.0
    %993 = vmatmul.mubr.f32.gmra.mrb[0].mxu0 %v879
    %v994 = vpop.f32.mrb[0].mxu0
    %v995 = vadd.f32 %v127, %v994
    %v996 = vpop.f32.mrb[0].mxu0
    %997 = vmatprep.mubr.f32.mxu0 0.0
    %998 = vmatmul.mubr.f32.gmra.mrb[0].mxu0 %v882
    %v999 = vpop.f32.mrb[0].mxu0
    %v1000 = vadd.f32 %v127, %v999
    %v1001 = vpop.f32.mrb[0].mxu0
    %1002 = vmatprep.mubr.f32.mxu0 0.0
    %1003 = vmatmul.mubr.f32.gmra.mrb[0].mxu0 %v885
    %v1004 = vpop.f32.mrb[0].mxu0
    %v1005 = vadd.f32 %v127, %v1004
    %v1006 = vpop.f32.mrb[0].mxu0
    %1007 = vmatprep.mubr.f32.mxu0 0.0
    %1008 = vmatmul.mubr.f32.gmra.mrb[0].mxu0 %v888
    %v1009 = vpop.f32.mrb[0].mxu0
    %v1010 = vadd.f32 %v127, %v1009
    %v1011 = vpop.f32.mrb[0].mxu0
    %1012 = vmatprep.mubr.f32.mxu0 0.0
    %1013 = vmatmul.mubr.f32.gmra.mrb[0].mxu0 %v891
    %v1014 = vpop.f32.mrb[0].mxu0
    %v1015 = vadd.f32 %v127, %v1014
    %v1016 = vpop.f32.mrb[0].mxu0
    %1017 = vmatprep.mubr.f32.mxu0 0.0
    %1018 = vmatmul.mubr.f32.gmra.mrb[0].mxu0 %v894
    %v1019 = vpop.f32.mrb[0].mxu0
    %v1020 = vadd.f32 %v127, %v1019
    %v1021 = vpop.f32.mrb[0].mxu0
    %1022 = vmatprep.mubr.f32.mxu0 0.0
    %1023 = vmatmul.mubr.f32.gmra.mrb[0].mxu0 %v897
    %v1024 = vpop.f32.mrb[0].mxu0
    %v1025 = vadd.f32 %v127, %v1024
    %v1026 = vpop.f32.mrb[0].mxu0
    %1027 = vmatprep.mubr.f32.mxu0 0.0
    %1028 = vmatmul.mubr.f32.gmra.mrb[0].mxu0 %v900
    %v1029 = vpop.f32.mrb[0].mxu0
    %v1030 = vadd.f32 %v127, %v1029
    %v1031 = vpop.f32.mrb[0].mxu0
    %1032 = vmatprep.mubr.f32.mxu0 0.0
    %1033 = vmatmul.mubr.f32.gmra.mrb[0].mxu0 %v903
    %v1034 = vpop.f32.mrb[0].mxu0
    %v1035 = vadd.f32 %v127, %v1034
    %v1036 = vpop.f32.mrb[0].mxu0
    %1037 = vmatprep.mubr.f32.mxu0 0.0
    %1038 = vmatmul.mubr.f32.gmra.mrb[0].mxu0 %v906
    %v1039 = vpop.f32.mrb[0].mxu0
    %v1040 = vadd.f32 %v127, %v1039
    %v1041 = vpop.f32.mrb[0].mxu0
    %1042 = vmatprep.mubr.f32.mxu0 0.0
    %1043 = vmatmul.mubr.f32.gmra.mrb[0].mxu0 %v909
    %v1044 = vpop.f32.mrb[0].mxu0
    %v1045 = vadd.f32 %v127, %v1044
    %v1046 = vpop.f32.mrb[0].mxu0
    %1047 = vmatprep.mubr.f32.mxu0 0.0
    %1048 = vmatmul.mubr.f32.gmra.mrb[0].mxu0 %v912
    %v1049 = vpop.f32.mrb[0].mxu0
    %v1050 = vadd.f32 %v127, %v1049
    %v1051 = vpop.f32.mrb[0].mxu0
    %1052 = vmatprep.mubr.f32.mxu0 0.0
    %1053 = vmatmul.mubr.f32.gmra.mrb[0].mxu0 %v915
    %v1054 = vpop.f32.mrb[0].mxu0
    %v1055 = vadd.f32 %v127, %v1054
    %v1056 = vpop.f32.mrb[0].mxu0
    %1057 = vmatprep.mubr.f32.mxu0 0.0
    %1058 = vmatmul.mubr.f32.gmra.mrb[0].mxu0 %v918
    %v1059 = vpop.f32.mrb[0].mxu0
    %v1060 = vadd.f32 %v127, %v1059
    %v1061 = vpop.f32.mrb[0].mxu0
    %1062 = vmatprep.mubr.f32.mxu0 0.0
    %1063 = vmatmul.mubr.f32.gmra.mrb[0].mxu0 %v921
    %v1064 = vpop.f32.mrb[0].mxu0
    %v1065 = vadd.f32 %v127, %v1064
    %v1066 = vpop.f32.mrb[0].mxu0
    %1067 = vdwg.mxu0
    %v1068 = vmax.f32 %v990, 0.0
    %v1069 = vmax.f32 %v995, 0.0
    %v1070 = vmax.f32 %v1000, 0.0
    %v1071 = vmax.f32 %v1005, 0.0
    %v1072 = vmax.f32 %v1010, 0.0
    %v1073 = vmax.f32 %v1015, 0.0
    %v1074 = vmax.f32 %v1020, 0.0
    %v1075 = vmax.f32 %v1025, 0.0
    %v1076 = vmax.f32 %v1030, 0.0
    %v1077 = vmax.f32 %v1035, 0.0
    %v1078 = vmax.f32 %v1040, 0.0
    %v1079 = vmax.f32 %v1045, 0.0
    %v1080 = vmax.f32 %v1050, 0.0
    %v1081 = vmax.f32 %v1055, 0.0
    %v1082 = vmax.f32 %v1060, 0.0
    %v1083 = vmax.f32 %v1065, 0.0
    %v1084 = vadd.f32 %v1068, %v1069
    %v1085 = vadd.f32 %v1084, %v1070
    %v1086 = vadd.f32 %v1085, %v1071
    %v1087 = vadd.f32 %v1086, %v1072
    %v1088 = vadd.f32 %v1087, %v1073
    %v1089 = vadd.f32 %v1088, %v1074
    %v1090 = vadd.f32 %v1089, %v1075
    %v1091 = vadd.f32 %v1090, %v1076
    %v1092 = vadd.f32 %v1091, %v1077
    %v1093 = vadd.f32 %v1092, %v1078
    %v1094 = vadd.f32 %v1093, %v1079
    %v1095 = vadd.f32 %v1094, %v1080
    %v1096 = vadd.f32 %v1095, %v1081
    %v1097 = vadd.f32 %v1096, %v1082
    %v1098 = vadd.f32 %v1097, %v1083
    %v1099 = vrot.slane %v1098, 4
    %v1100 = vadd.f32 %v1098, %v1099
    %v1101 = vrot.slane %v1100, 2
    %v1102 = vadd.f32 %v1100, %v1101
    %v1103 = vrot.slane %v1102, 1
    %v1104 = vadd.f32 %v1102, %v1103
    %v1105 = vadd.f32 %v858, %v1104
    %vm1106 = vcmask 1040384
    %v1107 = vsel %vm1106, %v610, %v1105
    %v1108 = vld [vmem:[%s4] sm:$0xff]
    %v1109 = vld [vmem:[%s4 + $0x8] sm:$0xff]
    %v1110 = vld [vmem:[%s4 + $0x10] sm:$0xff]
    %v1111 = vld [vmem:[%s4 + $0x18] sm:$0xff]
    %v1112 = vld [vmem:[%s4 + $0x20] sm:$0xff]
    %v1113 = vld [vmem:[%s4 + $0x28] sm:$0xff]
    %v1114 = vld [vmem:[%s4 + $0x30] sm:$0xff]
    %v1115 = vld [vmem:[%s4 + $0x38] sm:$0xff]
    %v1116 = vld [vmem:[%s4 + $0x40] sm:$0xff]
    %v1117 = vld [vmem:[%s4 + $0x48] sm:$0xff]
    %v1118 = vld [vmem:[%s4 + $0x50] sm:$0xff]
    %v1119 = vld [vmem:[%s4 + $0x58] sm:$0xff]
    %v1120 = vld [vmem:[%s4 + $0x60] sm:$0xff]
    %v1121 = vld [vmem:[%s4 + $0x68] sm:$0xff]
    %v1122 = vld [vmem:[%s4 + $0x70] sm:$0xff]
    %v1123 = vld [vmem:[%s4 + $0x78] sm:$0xff]
    %v1124 = vld [vmem:[%s4 + $0x80] sm:$0xff]
    %v1125 = vld [vmem:[%s4 + $0x88] sm:$0xff]
    %v1126 = vld [vmem:[%s4 + $0x90] sm:$0xff]
    %v1127 = vld [vmem:[%s4 + $0x98] sm:$0xff]
    %v1128 = vld [vmem:[%s4 + $0xa0] sm:$0x1]
    %1129 = vmatprep.subr.mxu0 0.0
    %1130 = vmatpush1.msra.mxu0 %v1112
    %1131 = vmatprep.subr.mxu0 0.0
    %1132 = vmatpush1.msra.mxu0 %v1113
    %1133 = vmatprep.subr.mxu0 0.0
    %1134 = vmatpush1.msra.mxu0 %v1114
    %1135 = vmatprep.subr.mxu0 0.0
    %1136 = vmatpush1.msra.mxu0 %v1115
    %1137 = vmatprep.subr.mxu0 0.0
    %1138 = vmatpush1.msra.mxu0 %v1116
    %1139 = vmatprep.subr.mxu0 0.0
    %1140 = vmatpush1.msra.mxu0 %v1117
    %1141 = vmatprep.subr.mxu0 0.0
    %1142 = vmatpush1.msra.mxu0 %v1118
    %1143 = vmatprep.subr.mxu0 0.0
    %1144 = vmatpush1.msra.mxu0 %v1119
    %1145 = vmatprep.subr.mxu0 0.0
    %1146 = vmatpush1.msra.mxu0 %v1120
    %1147 = vmatprep.subr.mxu0 0.0
    %1148 = vmatpush1.msra.mxu0 %v1121
    %1149 = vmatprep.subr.mxu0 0.0
    %1150 = vmatpush1.msra.mxu0 %v1122
    %1151 = vmatprep.subr.mxu0 0.0
    %1152 = vmatpush1.msra.mxu0 %v1123
    %1153 = vmatprep.subr.mxu0 0.0
    %1154 = vmatpush1.msra.mxu0 %v1124
    %1155 = vmatprep.subr.mxu0 0.0
    %1156 = vmatpush1.msra.mxu0 %v1125
    %1157 = vmatprep.subr.mxu0 0.0
    %1158 = vmatpush1.msra.mxu0 %v1126
    %1159 = vmatprep.subr.mxu0 0.0
    %1160 = vmatpush1.msra.mxu0 %v1127
    %1161 = vmatprep.subr.mxu0 0.0
    %1162 = vmatpush1.msra.mxu0 0.0
    %1163 = vmatprep.subr.mxu0 0.0
    %1164 = vmatpush1.msra.mxu0 0.0
    %1165 = vmatprep.subr.mxu0 0.0
    %1166 = vmatpush1.msra.mxu0 0.0
    %1167 = vmatprep.subr.mxu0 0.0
    %1168 = vmatpush1.msra.mxu0 0.0
    %1169 = vmatprep.subr.mxu0 0.0
    %1170 = vmatpush1.msra.mxu0 0.0
    %1171 = vmatprep.subr.mxu0 0.0
    %1172 = vmatpush1.msra.mxu0 0.0
    %1173 = vmatprep.subr.mxu0 0.0
    %1174 = vmatpush1.msra.mxu0 0.0
    %1175 = vmatprep.subr.mxu0 0.0
    %1176 = vmatpush1.msra.mxu0 0.0
    %1177 = vmatprep.subr.mxu0 0.0
    %1178 = vmatpush1.msra.mxu0 0.0
    %1179 = vmatprep.subr.mxu0 0.0
    %1180 = vmatpush1.msra.mxu0 0.0
    %1181 = vmatprep.subr.mxu0 0.0
    %1182 = vmatpush1.msra.mxu0 0.0
    %1183 = vmatprep.subr.mxu0 0.0
    %1184 = vmatpush1.msra.mxu0 0.0
    %1185 = vmatprep.subr.mxu0 0.0
    %1186 = vmatpush1.msra.mxu0 0.0
    %1187 = vmatprep.subr.mxu0 0.0
    %1188 = vmatpush1.msra.mxu0 0.0
    %1189 = vmatprep.subr.mxu0 0.0
    %1190 = vmatpush1.msra.mxu0 0.0
    %1191 = vmatprep.subr.mxu0 0.0
    %1192 = vmatpush1.msra.mxu0 0.0
    %1193 = vmatprep.mubr.f32.mxu0 0.0
    %1194 = vmatmul.mubr.f32.gmra.mrb[0].mxu0 %v1107
    %v1195 = vpop.f32.mrb[0].mxu0
    %v1196 = vadd.f32 0.0, %v1195
    %v1197 = vpop.f32.mrb[0].mxu0
    %1198 = vdwg.mxu0
    %v1200 = vsel %vm31, %v105, 0
    %1202 = vmatprep.subr.mxu0 0.0
    %1203 = vmatpush1.msra.mxu0 %v1108
    %1204 = vmatprep.subr.mxu0 0.0
    %1205 = vmatpush1.msra.mxu0 %v1109
    %1206 = vmatprep.subr.mxu0 0.0
    %1207 = vmatpush1.msra.mxu0 %v1110
    %1208 = vmatprep.subr.mxu0 0.0
    %1209 = vmatpush1.msra.mxu0 %v1111
    %1210 = vmatprep.subr.mxu0 0.0
    %1211 = vmatpush1.msra.mxu0 0.0
    %1212 = vmatprep.subr.mxu0 0.0
    %1213 = vmatpush1.msra.mxu0 0.0
    %1214 = vmatprep.subr.mxu0 0.0
    %1215 = vmatpush1.msra.mxu0 0.0
    %1216 = vmatprep.subr.mxu0 0.0
    %1217 = vmatpush1.msra.mxu0 0.0
    %1218 = vmatprep.subr.mxu0 0.0
    %1219 = vmatpush1.msra.mxu0 0.0
    %1220 = vmatprep.subr.mxu0 0.0
    %1221 = vmatpush1.msra.mxu0 0.0
    %1222 = vmatprep.subr.mxu0 0.0
    %1223 = vmatpush1.msra.mxu0 0.0
    %1224 = vmatprep.subr.mxu0 0.0
    %1225 = vmatpush1.msra.mxu0 0.0
    %1226 = vmatprep.subr.mxu0 0.0
    %1227 = vmatpush1.msra.mxu0 0.0
    %1228 = vmatprep.subr.mxu0 0.0
    %1229 = vmatpush1.msra.mxu0 0.0
    %1230 = vmatprep.subr.mxu0 0.0
    %1231 = vmatpush1.msra.mxu0 0.0
    %1232 = vmatprep.subr.mxu0 0.0
    %1233 = vmatpush1.msra.mxu0 0.0
    %1234 = vmatprep.subr.mxu0 0.0
    %1235 = vmatpush1.msra.mxu0 0.0
    %1236 = vmatprep.subr.mxu0 0.0
    %1237 = vmatpush1.msra.mxu0 0.0
    %1238 = vmatprep.subr.mxu0 0.0
    %1239 = vmatpush1.msra.mxu0 0.0
    %1240 = vmatprep.subr.mxu0 0.0
    %1241 = vmatpush1.msra.mxu0 0.0
    %1242 = vmatprep.subr.mxu0 0.0
    %1243 = vmatpush1.msra.mxu0 0.0
    %1244 = vmatprep.subr.mxu0 0.0
    %1245 = vmatpush1.msra.mxu0 0.0
    %1246 = vmatprep.subr.mxu0 0.0
    %1247 = vmatpush1.msra.mxu0 0.0
    %1248 = vmatprep.subr.mxu0 0.0
    %1249 = vmatpush1.msra.mxu0 0.0
    %1250 = vmatprep.subr.mxu0 0.0
    %1251 = vmatpush1.msra.mxu0 0.0
    %1252 = vmatprep.subr.mxu0 0.0
    %1253 = vmatpush1.msra.mxu0 0.0
    %1254 = vmatprep.subr.mxu0 0.0
    %1255 = vmatpush1.msra.mxu0 0.0
    %1256 = vmatprep.subr.mxu0 0.0
    %1257 = vmatpush1.msra.mxu0 0.0
    %1258 = vmatprep.subr.mxu0 0.0
    %1259 = vmatpush1.msra.mxu0 0.0
    %1260 = vmatprep.subr.mxu0 0.0
    %1261 = vmatpush1.msra.mxu0 0.0
    %1262 = vmatprep.subr.mxu0 0.0
    %1263 = vmatpush1.msra.mxu0 0.0
    %1264 = vmatprep.subr.mxu0 0.0
    %1265 = vmatpush1.msra.mxu0 0.0
    %1266 = vmatprep.mubr.f32.mxu0 0.0
    %1267 = vmatmul.mubr.f32.gmra.mrb[0].mxu0 %v1200
    %v1268 = vpop.f32.mrb[0].mxu0
    %v1269 = vadd.f32 %v1196, %v1268
    %v1270 = vpop.f32.mrb[0].mxu0
    %1271 = vdwg.mxu0
    %v1272 = vlaneseq
    %v1273 = vshrl.u32 %v1272, 7
    %v1274 = vsub.s32 0, %v1273
    %v1275 = vrot.slane %v1128, %v1274
    %v1276 = vadd.f32 %v1269, %v1275
    %1277 = vst [vmem:[#allocation2] sm:$0x3] %v1276
    // Predicated region
    $region22: #{tpu_custom_call.1} parent=1 // pred_check
      _
    $region23: #{tpu_custom_call.1} parent=1 // pred_check_branch
      %1279 = sbr.rel (0) target = $region25
    $region24: #{tpu_custom_call.1} parent=1 // pred_region
      %s1281 = ssub.s32 32, 32
      %1282 = vsyncadd [#allocation3], %s1281
      %s1284 = sshll.u32 [#allocation2], 4
      %s1285 = int_to_ptr.vmem [resolvable:$true] %s1284
      %1287 = dma.vmem_to_hbm [thread:$0]  %s1285, 32, %s5, [#allocation3]
    $region25: #{tpu_custom_call.1} parent=1 // pred_fallthru
      _
    // Predicated region
    $region26: #{tpu_custom_call.1} parent=1 // pred_check
      _
    $region27: #{tpu_custom_call.1} parent=1 // pred_check_branch
      %1289 = sbr.rel (0) target = $region29
    $region28: #{tpu_custom_call.1} parent=1 // pred_region
      %1290 = dma.done [#allocation3], 32
    $region29: #{tpu_custom_call.1} parent=1 // pred_fallthru
      _
    %1291 = vsyncpa [#allocation3], 1

</llo_original>
